<compile_context>
chip_gen: v7x
topology: tpu7x:2x2x1
jax: 0.10.0
libtpu: 0.0.40
codegen_flags: <defaults>
</compile_context>

<pallas_src>
import functools

import jax
import jax.numpy as jnp
from jax.experimental import pallas as pl
from jax.experimental.pallas import tpu as pltpu


# ----------------------------------------------------------------------------
# Kernel
# ----------------------------------------------------------------------------
def _base_mlp_kernel(D, skips, compute_dtype, x_ref, *refs):
    """refs = (per-layer weights/biases..., out_ref).

    Per-layer refs: (w, b) for normal layers, (w_x, w_h, b) for skip layers
    (concat order [x, out] -> first in_channels rows of the original weight
    multiply x), then (w_final, b_final).  Weights are already compute_dtype
    and (optionally) block-diagonal row-group packed; biases are f32.
    """
    out_ref = refs[-1]
    p = refs[:-1]

    # In-kernel cast: x is DMA'd in its native dtype (no extra HBM pass).
    x = x_ref[...].astype(compute_dtype)
    h = x
    idx = 0
    for i in range(D):
        if i in skips:
            w_x = p[idx][...]
            w_h = p[idx + 1][...]
            b = p[idx + 2][...]
            idx += 3
            acc = (jnp.dot(x, w_x, preferred_element_type=jnp.float32)
                   + jnp.dot(h, w_h, preferred_element_type=jnp.float32))
        else:
            w = p[idx][...]
            b = p[idx + 1][...]
            idx += 2
            acc = jnp.dot(h, w, preferred_element_type=jnp.float32)
        # bias + ReLU on the f32 accumulator (v5e has no bf16 VPU datapath).
        acc = jnp.maximum(acc + b, 0.0)
        h = acc.astype(compute_dtype)     # no-op when compute_dtype == f32
    wf = p[idx][...]
    bf = p[idx + 1][...]
    out = jnp.dot(h, wf, preferred_element_type=jnp.float32) + bf  # final_act=False
    out_ref[...] = out.astype(out_ref.dtype)


# ----------------------------------------------------------------------------
# One-time parameter preparation (hoisted out of the forward path)
# ----------------------------------------------------------------------------
def _block_diag(w, g):
    """(K, N) -> block-diagonal (g*K, g*N) with g copies of w on the diagonal."""
    if g == 1:
        return w
    k, n = w.shape
    out = jnp.zeros((g, k, g, n), w.dtype)
    out = out.at[jnp.arange(g), :, jnp.arange(g), :].set(w)
    return out.reshape(g * k, g * n)


def prepare_base_mlp_params(params, *, in_channels, skips,
                            compute_dtype=jnp.bfloat16, group=None):
    """Split skip weights, cast weights to compute_dtype, build row-group-
    packed (block-diagonal) weights.  Run ONCE; returns (flat_params, config).
    """
    D = len(params) - 1
    W = params[0][0].shape[1]
    out_channels = params[-1][0].shape[1]
    skips = tuple(sorted(int(s) for s in skips))
    if group is None:
        # Pack G independent rows into the 128-wide lane axis for narrow nets.
        group = max(1, 128 // max(in_channels, W))

    flat = []
    for li, (w, b) in enumerate(params):
        if li < D and li in skips:
            # torch.cat([x, out], -1): first in_channels rows multiply x.
            flat.append(_block_diag(jnp.asarray(w[:in_channels], compute_dtype), group))
            flat.append(_block_diag(jnp.asarray(w[in_channels:], compute_dtype), group))
        else:
            flat.append(_block_diag(jnp.asarray(w, compute_dtype), group))
        flat.append(jnp.tile(jnp.asarray(b, jnp.float32), group).reshape(1, -1))

    config = dict(D=D, W=W, in_channels=in_channels, out_channels=out_channels,
                  skips=skips, group=group, compute_dtype=compute_dtype)
    return flat, config


# ----------------------------------------------------------------------------
# Forward (jit this; all config args are bound via functools.partial)
# ----------------------------------------------------------------------------
def base_mlp_forward(x, flat_params, *, D, W, in_channels, out_channels,
                     skips, group, compute_dtype, tile_rows=2048):
    """x: (..., in_channels) -> (..., out_channels)."""
    n_expected = sum(3 if i in skips else 2 for i in range(D)) + 2
    assert len(flat_params) == n_expected, (len(flat_params), n_expected)

    orig_shape = x.shape
    assert orig_shape[-1] == in_channels
    x2 = x.reshape(-1, in_channels)
    n = x2.shape[0]

    # Pack `group` rows into the lane axis (contiguous reshape -> free).
    if n % group:
        # TODO(synk): tiny (< group rows) pad; avoidable with a tail kernel call.
        x2 = jnp.pad(x2, ((0, group - n % group), (0, 0)))
    m = x2.shape[0] // group
    x2 = x2.reshape(m, group * in_channels)

    # Row tile (in packed rows): big enough to amortize the ~0.35us/step and
    # the per-step MXU RHS re-push; dtype-aligned; capped so a "parallel" grid
    # keeps >= 2 steps (v7x megacore).  No row padding: ragged last block is
    # masked by Pallas (cdiv grid).
    itemsize_min = min(x2.dtype.itemsize, jnp.dtype(compute_dtype).itemsize)
    mult = max(8, 32 // itemsize_min)
    tile = min(max(1, tile_rows // group), m)
    tile = ((tile + mult - 1) // mult) * mult
    if m > 2 * mult and pl.cdiv(m, tile) < 2:
        tile = ((pl.cdiv(m, 2) + mult - 1) // mult) * mult
    grid = (pl.cdiv(m, tile),)

    in_specs = [pl.BlockSpec((tile, group * in_channels), lambda i: (i, 0))]
    for arr in flat_params:
        # Full-array, grid-resident blocks (constant index_map).
        in_specs.append(pl.BlockSpec(arr.shape, lambda i: (0, 0)))

    out_w = group * out_channels
    out_specs = pl.BlockSpec((tile, out_w), lambda i: (i, 0))
    out_shape = jax.ShapeDtypeStruct((m, out_w), x.dtype)

    # VMEM budget: actual double-buffered blocks + f32 intermediates, clamped
    # to ~3/4 of the chip's physical VMEM (64 MiB/TC on v7x, 128 MiB on v6e).
    param_bytes = sum(int(a.size) * a.dtype.itemsize for a in flat_params)
    est = (2 * tile * group * in_channels * x2.dtype.itemsize
           + 2 * tile * out_w * jnp.dtype(x.dtype).itemsize
           + 2 * param_bytes
           + 4 * tile * group * W * 4)
    try:
        vmem_cap = int(pltpu.get_tpu_info().vmem_capacity_bytes)
    except Exception:
        vmem_cap = 64 * 1024 * 1024
    vmem_limit = int(min(vmem_cap * 3 // 4, max(32 * 1024 * 1024, 2 * est)))

    # Advisory cost estimate for XLA's scheduler.
    flops = 2 * m * sum(int(a.shape[0]) * int(a.shape[1])
                        for a in flat_params if a.shape[0] > 1)
    bytes_accessed = (int(x2.size) * x2.dtype.itemsize + param_bytes
                      + m * out_w * jnp.dtype(x.dtype).itemsize)
    cost = pl.CostEstimate(flops=int(flops), transcendentals=0,
                           bytes_accessed=int(bytes_accessed))

    # TODO(synk): output width group*out_channels may still be < 128 lanes;
    # full lane-density needs fusing this MLP into its consumer kernel.
    kernel = functools.partial(_base_mlp_kernel, D, skips, compute_dtype)
    out = pl.pallas_call(
        kernel,
        out_shape=out_shape,
        grid=grid,
        in_specs=in_specs,
        out_specs=out_specs,
        compiler_params=pltpu.CompilerParams(
            dimension_semantics=("parallel",),   # shards row tiles across TCs
            vmem_limit_bytes=vmem_limit),
        cost_estimate=cost,
    )(x2, *flat_params)

    # Unpack lane groups back to rows, drop pad rows, restore leading dims.
    out = out.reshape(m * group, out_channels)[:n]
    return out.reshape(*orig_shape[:-1], out_channels)


# ----------------------------------------------------------------------------
# Synthetic params + pure-JAX reference (mirrors the PyTorch forward)
# ----------------------------------------------------------------------------
def init_base_mlp_params(key, D, W, in_channels, out_channels, skips):
    params = []
    for i in range(D):
        if i == 0:
            fan_in = in_channels
        elif i in skips:
            fan_in = W + in_channels
        else:
            fan_in = W
        key, kw, kb = jax.random.split(key, 3)
        scale = 1.0 / jnp.sqrt(jnp.float32(fan_in))
        w = jax.random.normal(kw, (fan_in, W), jnp.float32) * scale
        b = jax.random.normal(kb, (W,), jnp.float32) * scale
        params.append((w, b))
    key, kw, kb = jax.random.split(key, 3)
    scale = 1.0 / jnp.sqrt(jnp.float32(W))
    wf = jax.random.normal(kw, (W, out_channels), jnp.float32) * scale
    bf = jax.random.normal(kb, (out_channels,), jnp.float32) * scale
    params.append((wf, bf))
    return params


def base_mlp_reference(x, params, *, D, skips, compute_dtype=None):
    def mm(a, w):
        if compute_dtype is not None:
            a = a.astype(compute_dtype)
            w = w.astype(compute_dtype)
        return jnp.dot(a, w, preferred_element_type=jnp.float32)

    xin = x.astype(jnp.float32)
    out = xin
    for i in range(D):
        w, b = params[i]
        if i in skips:
            out = jnp.concatenate([xin, out], axis=-1)
        out = jnp.maximum(mm(out, w) + b, 0.0)
    wf, bf = params[D]
    return mm(out, wf) + bf


if __name__ == "__main__":
    # Small config consistent with the module: D layers, hidden W, skip at D//2.
    D = 4
    W = 32
    in_channels = 16
    out_channels = 4
    skips = [2]

    key = jax.random.PRNGKey(0)
    key_params, key_x1, key_x2 = jax.random.split(key, 3)
    params = init_base_mlp_params(key_params, D, W, in_channels, out_channels, skips)

    # --- f32 path: exact check (also exercises the pad-to-group + ragged block)
    flat_f32, cfg_f32 = prepare_base_mlp_params(
        params, in_channels=in_channels, skips=skips, compute_dtype=jnp.float32)
    fwd_f32 = jax.jit(functools.partial(base_mlp_forward, **cfg_f32, tile_rows=2048))
    x_small = jax.random.normal(key_x1, (2, 9, in_channels), jnp.float32)  # 18 rows
    out_f32 = jax.block_until_ready(fwd_f32(x_small, flat_f32))
    ref_f32 = base_mlp_reference(x_small, params, D=D, skips=skips)
    assert out_f32.shape == (2, 9, out_channels), out_f32.shape
    assert jnp.allclose(out_f32, ref_f32, atol=1e-4, rtol=1e-4), \
        float(jnp.max(jnp.abs(out_f32 - ref_f32)))

    # --- bf16 path (default): multi-step parallel grid with a ragged last block
    flat_bf16, cfg_bf16 = prepare_base_mlp_params(
        params, in_channels=in_channels, skips=skips)          # bf16 weights
    fwd_bf16 = jax.jit(functools.partial(base_mlp_forward, **cfg_bf16, tile_rows=2048))
    x_big = jax.random.normal(key_x2, (4, 200, in_channels), jnp.float32)  # 800 rows
    out_bf16 = jax.block_until_ready(fwd_bf16(x_big, flat_bf16))
    ref_mixed = base_mlp_reference(x_big, params, D=D, skips=skips,
                                   compute_dtype=jnp.bfloat16)
    assert out_bf16.shape == (4, 200, out_channels), out_bf16.shape
    assert jnp.allclose(out_bf16, ref_mixed, atol=1e-2, rtol=1e-2), \
        float(jnp.max(jnp.abs(out_bf16 - ref_mixed)))
    ref_big_f32 = base_mlp_reference(x_big, params, D=D, skips=skips)
    assert jnp.allclose(out_bf16, ref_big_f32, atol=1e-1, rtol=1e-1), \
        float(jnp.max(jnp.abs(out_bf16 - ref_big_f32)))

    print("KERNEL_OK")
</pallas_src>

<mosaic_0001>
module attributes {stable_mosaic.version = 11 : i64} {
  func.func @_base_mlp_kernel(%arg0: i32, %arg1: memref<8x64xf32, #tpu.memory_space<vmem>>, %arg2: memref<64x128xf32, #tpu.memory_space<vmem>>, %arg3: memref<1x128xf32, #tpu.memory_space<vmem>>, %arg4: memref<128x128xf32, #tpu.memory_space<vmem>>, %arg5: memref<1x128xf32, #tpu.memory_space<vmem>>, %arg6: memref<64x128xf32, #tpu.memory_space<vmem>>, %arg7: memref<128x128xf32, #tpu.memory_space<vmem>>, %arg8: memref<1x128xf32, #tpu.memory_space<vmem>>, %arg9: memref<128x128xf32, #tpu.memory_space<vmem>>, %arg10: memref<1x128xf32, #tpu.memory_space<vmem>>, %arg11: memref<128x16xf32, #tpu.memory_space<vmem>>, %arg12: memref<1x16xf32, #tpu.memory_space<vmem>>, %arg13: memref<8x16xf32, #tpu.memory_space<vmem>>) attributes {dimension_semantics = [#tpu.dimension_semantics<parallel>], iteration_bounds = array<i64: 1>, scalar_prefetch = 0 : i64, scratch_operands = 0 : i64, tpu.core_type = #tpu.core_type<tc>, window_params = [{transform_indices = @transform_0, window_bounds = array<i64: 8, 64>}, {pipeline_mode = #tpu.pipeline_mode<synchronous>, transform_indices = @transform_1, window_bounds = array<i64: 64, 128>}, {pipeline_mode = #tpu.pipeline_mode<synchronous>, transform_indices = @transform_2, window_bounds = array<i64: 1, 128>}, {pipeline_mode = #tpu.pipeline_mode<synchronous>, transform_indices = @transform_3, window_bounds = array<i64: 128, 128>}, {pipeline_mode = #tpu.pipeline_mode<synchronous>, transform_indices = @transform_4, window_bounds = array<i64: 1, 128>}, {pipeline_mode = #tpu.pipeline_mode<synchronous>, transform_indices = @transform_5, window_bounds = array<i64: 64, 128>}, {pipeline_mode = #tpu.pipeline_mode<synchronous>, transform_indices = @transform_6, window_bounds = array<i64: 128, 128>}, {pipeline_mode = #tpu.pipeline_mode<synchronous>, transform_indices = @transform_7, window_bounds = array<i64: 1, 128>}, {pipeline_mode = #tpu.pipeline_mode<synchronous>, transform_indices = @transform_8, window_bounds = array<i64: 128, 128>}, {pipeline_mode = #tpu.pipeline_mode<synchronous>, transform_indices = @transform_9, window_bounds = array<i64: 1, 128>}, {pipeline_mode = #tpu.pipeline_mode<synchronous>, transform_indices = @transform_10, window_bounds = array<i64: 128, 16>}, {pipeline_mode = #tpu.pipeline_mode<synchronous>, transform_indices = @transform_11, window_bounds = array<i64: 1, 16>}, {transform_indices = @transform_12, window_bounds = array<i64: 8, 16>}]} {
    %c0 = arith.constant 0 : index
    %c0_0 = arith.constant 0 : index
    %0 = vector.load %arg1[%c0, %c0_0] : memref<8x64xf32, #tpu.memory_space<vmem>>, vector<8x64xf32>
    %c0_1 = arith.constant 0 : index
    %c0_2 = arith.constant 0 : index
    %1 = vector.load %arg2[%c0_1, %c0_2] : memref<64x128xf32, #tpu.memory_space<vmem>>, vector<64x128xf32>
    %c0_3 = arith.constant 0 : index
    %c0_4 = arith.constant 0 : index
    %2 = vector.load %arg3[%c0_3, %c0_4] : memref<1x128xf32, #tpu.memory_space<vmem>>, vector<1x128xf32>
    %cst = arith.constant dense<0.000000e+00> : vector<8x128xf32>
    %3 = tpu.matmul %0, %1, %cst {dimension_numbers = #tpu.dot_dimension_numbers<[1], [0], [0], [1], [0, 0, 1, 1], [], []>} : vector<8x64xf32>, vector<64x128xf32>, vector<8x128xf32> -> vector<8x128xf32>
    %4 = vector.broadcast %2 : vector<1x128xf32> to vector<8x128xf32>
    %5 = arith.addf %3, %4 : vector<8x128xf32>
    %cst_5 = arith.constant 0.000000e+00 : f32
    %6 = vector.broadcast %cst_5 : f32 to vector<8x128xf32>
    %7 = arith.maximumf %5, %6 : vector<8x128xf32>
    %c0_6 = arith.constant 0 : index
    %c0_7 = arith.constant 0 : index
    %8 = vector.load %arg4[%c0_6, %c0_7] : memref<128x128xf32, #tpu.memory_space<vmem>>, vector<128x128xf32>
    %c0_8 = arith.constant 0 : index
    %c0_9 = arith.constant 0 : index
    %9 = vector.load %arg5[%c0_8, %c0_9] : memref<1x128xf32, #tpu.memory_space<vmem>>, vector<1x128xf32>
    %cst_10 = arith.constant dense<0.000000e+00> : vector<8x128xf32>
    %10 = tpu.matmul %7, %8, %cst_10 {dimension_numbers = #tpu.dot_dimension_numbers<[1], [0], [0], [1], [0, 0, 1, 1], [], []>} : vector<8x128xf32>, vector<128x128xf32>, vector<8x128xf32> -> vector<8x128xf32>
    %11 = vector.broadcast %9 : vector<1x128xf32> to vector<8x128xf32>
    %12 = arith.addf %10, %11 : vector<8x128xf32>
    %cst_11 = arith.constant 0.000000e+00 : f32
    %13 = vector.broadcast %cst_11 : f32 to vector<8x128xf32>
    %14 = arith.maximumf %12, %13 : vector<8x128xf32>
    %c0_12 = arith.constant 0 : index
    %c0_13 = arith.constant 0 : index
    %15 = vector.load %arg6[%c0_12, %c0_13] : memref<64x128xf32, #tpu.memory_space<vmem>>, vector<64x128xf32>
    %c0_14 = arith.constant 0 : index
    %c0_15 = arith.constant 0 : index
    %16 = vector.load %arg7[%c0_14, %c0_15] : memref<128x128xf32, #tpu.memory_space<vmem>>, vector<128x128xf32>
    %c0_16 = arith.constant 0 : index
    %c0_17 = arith.constant 0 : index
    %17 = vector.load %arg8[%c0_16, %c0_17] : memref<1x128xf32, #tpu.memory_space<vmem>>, vector<1x128xf32>
    %cst_18 = arith.constant dense<0.000000e+00> : vector<8x128xf32>
    %18 = tpu.matmul %0, %15, %cst_18 {dimension_numbers = #tpu.dot_dimension_numbers<[1], [0], [0], [1], [0, 0, 1, 1], [], []>} : vector<8x64xf32>, vector<64x128xf32>, vector<8x128xf32> -> vector<8x128xf32>
    %cst_19 = arith.constant dense<0.000000e+00> : vector<8x128xf32>
    %19 = tpu.matmul %14, %16, %cst_19 {dimension_numbers = #tpu.dot_dimension_numbers<[1], [0], [0], [1], [0, 0, 1, 1], [], []>} : vector<8x128xf32>, vector<128x128xf32>, vector<8x128xf32> -> vector<8x128xf32>
    %20 = arith.addf %18, %19 : vector<8x128xf32>
    %21 = vector.broadcast %17 : vector<1x128xf32> to vector<8x128xf32>
    %22 = arith.addf %20, %21 : vector<8x128xf32>
    %cst_20 = arith.constant 0.000000e+00 : f32
    %23 = vector.broadcast %cst_20 : f32 to vector<8x128xf32>
    %24 = arith.maximumf %22, %23 : vector<8x128xf32>
    %c0_21 = arith.constant 0 : index
    %c0_22 = arith.constant 0 : index
    %25 = vector.load %arg9[%c0_21, %c0_22] : memref<128x128xf32, #tpu.memory_space<vmem>>, vector<128x128xf32>
    %c0_23 = arith.constant 0 : index
    %c0_24 = arith.constant 0 : index
    %26 = vector.load %arg10[%c0_23, %c0_24] : memref<1x128xf32, #tpu.memory_space<vmem>>, vector<1x128xf32>
    %cst_25 = arith.constant dense<0.000000e+00> : vector<8x128xf32>
    %27 = tpu.matmul %24, %25, %cst_25 {dimension_numbers = #tpu.dot_dimension_numbers<[1], [0], [0], [1], [0, 0, 1, 1], [], []>} : vector<8x128xf32>, vector<128x128xf32>, vector<8x128xf32> -> vector<8x128xf32>
    %28 = vector.broadcast %26 : vector<1x128xf32> to vector<8x128xf32>
    %29 = arith.addf %27, %28 : vector<8x128xf32>
    %cst_26 = arith.constant 0.000000e+00 : f32
    %30 = vector.broadcast %cst_26 : f32 to vector<8x128xf32>
    %31 = arith.maximumf %29, %30 : vector<8x128xf32>
    %c0_27 = arith.constant 0 : index
    %c0_28 = arith.constant 0 : index
    %32 = vector.load %arg11[%c0_27, %c0_28] : memref<128x16xf32, #tpu.memory_space<vmem>>, vector<128x16xf32>
    %c0_29 = arith.constant 0 : index
    %c0_30 = arith.constant 0 : index
    %33 = vector.load %arg12[%c0_29, %c0_30] : memref<1x16xf32, #tpu.memory_space<vmem>>, vector<1x16xf32>
    %cst_31 = arith.constant dense<0.000000e+00> : vector<8x16xf32>
    %34 = tpu.matmul %31, %32, %cst_31 {dimension_numbers = #tpu.dot_dimension_numbers<[1], [0], [0], [1], [0, 0, 1, 1], [], []>} : vector<8x128xf32>, vector<128x16xf32>, vector<8x16xf32> -> vector<8x16xf32>
    %35 = vector.broadcast %33 : vector<1x16xf32> to vector<8x16xf32>
    %36 = arith.addf %34, %35 : vector<8x16xf32>
    %c0_32 = arith.constant 0 : index
    %c0_33 = arith.constant 0 : index
    %37 = vector.load %arg13[%c0_32, %c0_33] : memref<8x16xf32, #tpu.memory_space<vmem>>, vector<8x16xf32>
    tpu.vector_store %arg13[%c0_32, %c0_33], %36 {strides = array<i32>} : memref<8x16xf32, #tpu.memory_space<vmem>>, vector<8x16xf32>,
    return
  }
  func.func @transform_0(%arg0: i32) -> (i32, i32) {
    %c0_i32 = arith.constant 0 : i32
    %c0_i32_0 = arith.constant 0 : i32
    return %arg0, %c0_i32 : i32, i32
  }
  func.func @transform_1(%arg0: i32) -> (i32, i32) {
    %c0_i32 = arith.constant 0 : i32
    %c0_i32_0 = arith.constant 0 : i32
    %c0_i32_1 = arith.constant 0 : i32
    return %c0_i32, %c0_i32_0 : i32, i32
  }
  func.func @transform_2(%arg0: i32) -> (i32, i32) {
    %c0_i32 = arith.constant 0 : i32
    %c0_i32_0 = arith.constant 0 : i32
    %c0_i32_1 = arith.constant 0 : i32
    return %c0_i32, %c0_i32_0 : i32, i32
  }
  func.func @transform_3(%arg0: i32) -> (i32, i32) {
    %c0_i32 = arith.constant 0 : i32
    %c0_i32_0 = arith.constant 0 : i32
    %c0_i32_1 = arith.constant 0 : i32
    return %c0_i32, %c0_i32_0 : i32, i32
  }
  func.func @transform_4(%arg0: i32) -> (i32, i32) {
    %c0_i32 = arith.constant 0 : i32
    %c0_i32_0 = arith.constant 0 : i32
    %c0_i32_1 = arith.constant 0 : i32
    return %c0_i32, %c0_i32_0 : i32, i32
  }
  func.func @transform_5(%arg0: i32) -> (i32, i32) {
    %c0_i32 = arith.constant 0 : i32
    %c0_i32_0 = arith.constant 0 : i32
    %c0_i32_1 = arith.constant 0 : i32
    return %c0_i32, %c0_i32_0 : i32, i32
  }
  func.func @transform_6(%arg0: i32) -> (i32, i32) {
    %c0_i32 = arith.constant 0 : i32
    %c0_i32_0 = arith.constant 0 : i32
    %c0_i32_1 = arith.constant 0 : i32
    return %c0_i32, %c0_i32_0 : i32, i32
  }
  func.func @transform_7(%arg0: i32) -> (i32, i32) {
    %c0_i32 = arith.constant 0 : i32
    %c0_i32_0 = arith.constant 0 : i32
    %c0_i32_1 = arith.constant 0 : i32
    return %c0_i32, %c0_i32_0 : i32, i32
  }
  func.func @transform_8(%arg0: i32) -> (i32, i32) {
    %c0_i32 = arith.constant 0 : i32
    %c0_i32_0 = arith.constant 0 : i32
    %c0_i32_1 = arith.constant 0 : i32
    return %c0_i32, %c0_i32_0 : i32, i32
  }
  func.func @transform_9(%arg0: i32) -> (i32, i32) {
    %c0_i32 = arith.constant 0 : i32
    %c0_i32_0 = arith.constant 0 : i32
    %c0_i32_1 = arith.constant 0 : i32
    return %c0_i32, %c0_i32_0 : i32, i32
  }
  func.func @transform_10(%arg0: i32) -> (i32, i32) {
    %c0_i32 = arith.constant 0 : i32
    %c0_i32_0 = arith.constant 0 : i32
    %c0_i32_1 = arith.constant 0 : i32
    return %c0_i32, %c0_i32_0 : i32, i32
  }
  func.func @transform_11(%arg0: i32) -> (i32, i32) {
    %c0_i32 = arith.constant 0 : i32
    %c0_i32_0 = arith.constant 0 : i32
    %c0_i32_1 = arith.constant 0 : i32
    return %c0_i32, %c0_i32_0 : i32, i32
  }
  func.func @transform_12(%arg0: i32) -> (i32, i32) {
    %c0_i32 = arith.constant 0 : i32
    %c0_i32_0 = arith.constant 0 : i32
    return %arg0, %c0_i32 : i32, i32
  }
}

</mosaic_0001>

<llo_original>
// kernel: base_mlp_forward.1
$region0: #{base_mlp_forward.1}
  #allocation0 [shape = 'u32[]', space=smem, size = 0x4, offset = 0x4, fixed_abs, tag = 'smem constant byte address 0x4 - core index']
  #allocation1 [shape = 'u32[144,128]{1,0:T(1,128)}', space=vmem, size = 0x12000, scoped, tag = 'internal scratch']
  %s0 = inlined_call_operand.vmem [shape: f32[5,64], index: 0, kind: input, shape index: {}]
  %s1 = inlined_call_operand.vmem [shape: f32[64,128], index: 1, kind: input, shape index: {}]
  %s2 = inlined_call_operand.vmem [shape: f32[1,128], index: 2, kind: input, shape index: {}]
  %s3 = inlined_call_operand.vmem [shape: f32[128,128], index: 3, kind: input, shape index: {}]
  %s4 = inlined_call_operand.vmem [shape: f32[1,128], index: 4, kind: input, shape index: {}]
  %s5 = inlined_call_operand.hbm [shape: f32[64,128], index: 5, kind: input, shape index: {}]
  %s6 = inlined_call_operand.vmem [shape: f32[128,128], index: 6, kind: input, shape index: {}]
  %s7 = inlined_call_operand.vmem [shape: f32[1,128], index: 7, kind: input, shape index: {}]
  %s8 = inlined_call_operand.hbm [shape: f32[128,128], index: 8, kind: input, shape index: {}]
  %s9 = inlined_call_operand.vmem [shape: f32[1,128], index: 9, kind: input, shape index: {}]
  %s10 = inlined_call_operand.vmem [shape: f32[128,16], index: 10, kind: input, shape index: {}]
  %s11 = inlined_call_operand.vmem [shape: f32[1,16], index: 11, kind: input, shape index: {}]
  %s12 = inlined_call_operand.vmem [shape: f32[5,16], index: 12, kind: output, shape index: {}]
  %s13 = sld [smem:[#allocation0]]
  $region66: #{base_mlp_forward.1} parent=0
    _
  %s15 = ssub.s32 1, %s13
  %s16 = scalar_select 0, %s15, %s13
  $region1: #{base_mlp_forward.1} parent=0
    #allocation2 [shape = 'u8[32768]{0}', space=vmem, size = 0x8000, scoped, tag = 'input window, operand 5, single buffered']
    #allocation3 [shape = 's32[1]{0}', space=sflag, size = 0x4, scoped, tag = 'scoped memory for base_mlp_forward.1']
    #allocation4 [shape = 'u8[65536]{0}', space=vmem, size = 0x10000, scoped, tag = 'input window, operand 8, single buffered']
    #allocation5 [shape = 's32[1]{0}', space=sflag, size = 0x4, scoped, tag = 'scoped memory for base_mlp_forward.1']
    %17 = vsyncpa [#allocation3], 0
    %18 = vsyncpa [#allocation5], 0
    // Predicated region
    $region2: #{base_mlp_forward.1} parent=1 // pred_check
      _
    $region3: #{base_mlp_forward.1} parent=1 // pred_check_branch
      %20 = sbr.rel (0) target = $region5
    $region4: #{base_mlp_forward.1} parent=1 // pred_region
      _
    $region5: #{base_mlp_forward.1} parent=1 // pred_fallthru
      _
    // Predicated region
    $region6: #{base_mlp_forward.1} parent=1 // pred_check
      _
    $region7: #{base_mlp_forward.1} parent=1 // pred_check_branch
      %22 = sbr.rel (0) target = $region9
    $region8: #{base_mlp_forward.1} parent=1 // pred_region
      _
    $region9: #{base_mlp_forward.1} parent=1 // pred_fallthru
      _
    // Predicated region
    $region10: #{base_mlp_forward.1} parent=1 // pred_check
      _
    $region11: #{base_mlp_forward.1} parent=1 // pred_check_branch
      %24 = sbr.rel (0) target = $region13
    $region12: #{base_mlp_forward.1} parent=1 // pred_region
      _
    $region13: #{base_mlp_forward.1} parent=1 // pred_fallthru
      _
    // Predicated region
    $region14: #{base_mlp_forward.1} parent=1 // pred_check
      _
    $region15: #{base_mlp_forward.1} parent=1 // pred_check_branch
      %26 = sbr.rel (0) target = $region17
    $region16: #{base_mlp_forward.1} parent=1 // pred_region
      _
    $region17: #{base_mlp_forward.1} parent=1 // pred_fallthru
      _
    // Predicated region
    $region18: #{base_mlp_forward.1} parent=1 // pred_check
      _
    $region19: #{base_mlp_forward.1} parent=1 // pred_check_branch
      %28 = sbr.rel (0) target = $region21
    $region20: #{base_mlp_forward.1} parent=1 // pred_region
      _
    $region21: #{base_mlp_forward.1} parent=1 // pred_fallthru
      _
    // Predicated region
    $region22: #{base_mlp_forward.1} parent=1 // pred_check
      _
    $region23: #{base_mlp_forward.1} parent=1 // pred_check_branch
      %30 = sbr.rel (0) target = $region25
    $region24: #{base_mlp_forward.1} parent=1 // pred_region
      %s32 = ssub.s32 1024, 1024
      %33 = vsyncadd [#allocation3], %s32
      %s34 = sshll.u32 [#allocation2], 4
      %s35 = int_to_ptr.vmem [resolvable:$true] %s34
      %40 = dma.hbm_to_vmem [thread:$0]  %s5, 1024, %s35, [#allocation3], 128, 128, 8
    $region25: #{base_mlp_forward.1} parent=1 // pred_fallthru
      _
    // Predicated region
    $region26: #{base_mlp_forward.1} parent=1 // pred_check
      _
    $region27: #{base_mlp_forward.1} parent=1 // pred_check_branch
      %42 = sbr.rel (0) target = $region29
    $region28: #{base_mlp_forward.1} parent=1 // pred_region
      _
    $region29: #{base_mlp_forward.1} parent=1 // pred_fallthru
      _
    // Predicated region
    $region30: #{base_mlp_forward.1} parent=1 // pred_check
      _
    $region31: #{base_mlp_forward.1} parent=1 // pred_check_branch
      %44 = sbr.rel (0) target = $region33
    $region32: #{base_mlp_forward.1} parent=1 // pred_region
      _
    $region33: #{base_mlp_forward.1} parent=1 // pred_fallthru
      _
    // Predicated region
    $region34: #{base_mlp_forward.1} parent=1 // pred_check
      _
    $region35: #{base_mlp_forward.1} parent=1 // pred_check_branch
      %46 = sbr.rel (0) target = $region37
    $region36: #{base_mlp_forward.1} parent=1 // pred_region
      %s48 = ssub.s32 2048, 2048
      %49 = vsyncadd [#allocation5], %s48
      %s50 = sshll.u32 [#allocation4], 4
      %s51 = int_to_ptr.vmem [resolvable:$true] %s50
      %56 = dma.hbm_to_vmem [thread:$0]  %s8, 2048, %s51, [#allocation5], 128, 128, 8
    $region37: #{base_mlp_forward.1} parent=1 // pred_fallthru
      _
    // Predicated region
    $region38: #{base_mlp_forward.1} parent=1 // pred_check
      _
    $region39: #{base_mlp_forward.1} parent=1 // pred_check_branch
      %58 = sbr.rel (0) target = $region41
    $region40: #{base_mlp_forward.1} parent=1 // pred_region
      _
    $region41: #{base_mlp_forward.1} parent=1 // pred_fallthru
      _
    // Predicated region
    $region42: #{base_mlp_forward.1} parent=1 // pred_check
      _
    $region43: #{base_mlp_forward.1} parent=1 // pred_check_branch
      %60 = sbr.rel (0) target = $region45
    $region44: #{base_mlp_forward.1} parent=1 // pred_region
      _
    $region45: #{base_mlp_forward.1} parent=1 // pred_fallthru
      _
    // Predicated region
    $region46: #{base_mlp_forward.1} parent=1 // pred_check
      _
    $region47: #{base_mlp_forward.1} parent=1 // pred_check_branch
      %62 = sbr.rel (0) target = $region49
    $region48: #{base_mlp_forward.1} parent=1 // pred_region
      _
    $region49: #{base_mlp_forward.1} parent=1 // pred_fallthru
      _
    // Predicated region
    $region50: #{base_mlp_forward.1} parent=1 // pred_check
      _
    $region51: #{base_mlp_forward.1} parent=1 // pred_check_branch
      %64 = sbr.rel (0) target = $region53
    $region52: #{base_mlp_forward.1} parent=1 // pred_region
      %65 = dma.done [#allocation3], 1024
    $region53: #{base_mlp_forward.1} parent=1 // pred_fallthru
      _
    // Predicated region
    $region54: #{base_mlp_forward.1} parent=1 // pred_check
      _
    $region55: #{base_mlp_forward.1} parent=1 // pred_check_branch
      %67 = sbr.rel (0) target = $region57
    $region56: #{base_mlp_forward.1} parent=1 // pred_region
      %68 = dma.done [#allocation5], 2048
    $region57: #{base_mlp_forward.1} parent=1 // pred_fallthru
      _
    %v69 = vld [vmem:[%s0] sm:$0xff]
    %v70 = vld [vmem:[%s1] sm:$0xff]
    %v71 = vld [vmem:[%s1 + $0x8] sm:$0xff]
    %v72 = vld [vmem:[%s1 + $0x10] sm:$0xff]
    %v73 = vld [vmem:[%s1 + $0x18] sm:$0xff]
    %v74 = vld [vmem:[%s1 + $0x20] sm:$0xff]
    %v75 = vld [vmem:[%s1 + $0x28] sm:$0xff]
    %v76 = vld [vmem:[%s1 + $0x30] sm:$0xff]
    %v77 = vld [vmem:[%s1 + $0x38] sm:$0xff]
    %v78 = vld [vmem:[%s2] sm:$0x1]
    %v80 = vlaneseq
    %v81 = vshrl.u32 %v80, 7
    %v82 = vsub.s32 0, %v81
    %v83 = vrot.slane %v78, %v82
    %vm85 = vcmask 523264
    %v87 = vsel %vm85, %v69, 0
    %89 = vmatprep.subr.mxu0 0.0
    %90 = vmatpush1.msra.mxu0 %v70
    %91 = vmatprep.subr.mxu0 0.0
    %92 = vmatpush1.msra.mxu0 %v71
    %93 = vmatprep.subr.mxu0 0.0
    %94 = vmatpush1.msra.mxu0 %v72
    %95 = vmatprep.subr.mxu0 0.0
    %96 = vmatpush1.msra.mxu0 %v73
    %97 = vmatprep.subr.mxu0 0.0
    %98 = vmatpush1.msra.mxu0 %v74
    %99 = vmatprep.subr.mxu0 0.0
    %100 = vmatpush1.msra.mxu0 %v75
    %101 = vmatprep.subr.mxu0 0.0
    %102 = vmatpush1.msra.mxu0 %v76
    %103 = vmatprep.subr.mxu0 0.0
    %104 = vmatpush1.msra.mxu0 %v77
    %105 = vmatprep.subr.mxu0 0.0
    %106 = vmatpush1.msra.mxu0 0.0
    %107 = vmatprep.subr.mxu0 0.0
    %108 = vmatpush1.msra.mxu0 0.0
    %109 = vmatprep.subr.mxu0 0.0
    %110 = vmatpush1.msra.mxu0 0.0
    %111 = vmatprep.subr.mxu0 0.0
    %112 = vmatpush1.msra.mxu0 0.0
    %113 = vmatprep.subr.mxu0 0.0
    %114 = vmatpush1.msra.mxu0 0.0
    %115 = vmatprep.subr.mxu0 0.0
    %116 = vmatpush1.msra.mxu0 0.0
    %117 = vmatprep.subr.mxu0 0.0
    %118 = vmatpush1.msra.mxu0 0.0
    %119 = vmatprep.subr.mxu0 0.0
    %120 = vmatpush1.msra.mxu0 0.0
    %121 = vmatprep.subr.mxu0 0.0
    %122 = vmatpush1.msra.mxu0 0.0
    %123 = vmatprep.subr.mxu0 0.0
    %124 = vmatpush1.msra.mxu0 0.0
    %125 = vmatprep.subr.mxu0 0.0
    %126 = vmatpush1.msra.mxu0 0.0
    %127 = vmatprep.subr.mxu0 0.0
    %128 = vmatpush1.msra.mxu0 0.0
    %129 = vmatprep.subr.mxu0 0.0
    %130 = vmatpush1.msra.mxu0 0.0
    %131 = vmatprep.subr.mxu0 0.0
    %132 = vmatpush1.msra.mxu0 0.0
    %133 = vmatprep.subr.mxu0 0.0
    %134 = vmatpush1.msra.mxu0 0.0
    %135 = vmatprep.subr.mxu0 0.0
    %136 = vmatpush1.msra.mxu0 0.0
    %137 = vmatprep.subr.mxu0 0.0
    %138 = vmatpush1.msra.mxu0 0.0
    %139 = vmatprep.subr.mxu0 0.0
    %140 = vmatpush1.msra.mxu0 0.0
    %141 = vmatprep.subr.mxu0 0.0
    %142 = vmatpush1.msra.mxu0 0.0
    %143 = vmatprep.subr.mxu0 0.0
    %144 = vmatpush1.msra.mxu0 0.0
    %145 = vmatprep.subr.mxu0 0.0
    %146 = vmatpush1.msra.mxu0 0.0
    %147 = vmatprep.subr.mxu0 0.0
    %148 = vmatpush1.msra.mxu0 0.0
    %149 = vmatprep.subr.mxu0 0.0
    %150 = vmatpush1.msra.mxu0 0.0
    %151 = vmatprep.subr.mxu0 0.0
    %152 = vmatpush1.msra.mxu0 0.0
    %153 = vmatprep.mubr.f32.mxu0 0.0
    %154 = vmatmul.mubr.f32.gmra.mrb[0].mxu0 %v87
    %v155 = vpop.f32.mrb[0].mxu0
    %v156 = vadd.f32 %v83, %v155
    %v157 = vpop.f32.mrb[0].mxu0
    %158 = vdwg.mxu0
    %v159 = vmax.f32 %v156, 0.0
    %v160 = vld [vmem:[%s3] sm:$0xff]
    %v161 = vld [vmem:[%s3 + $0x8] sm:$0xff]
    %v162 = vld [vmem:[%s3 + $0x10] sm:$0xff]
    %v163 = vld [vmem:[%s3 + $0x18] sm:$0xff]
    %v164 = vld [vmem:[%s3 + $0x20] sm:$0xff]
    %v165 = vld [vmem:[%s3 + $0x28] sm:$0xff]
    %v166 = vld [vmem:[%s3 + $0x30] sm:$0xff]
    %v167 = vld [vmem:[%s3 + $0x38] sm:$0xff]
    %v168 = vld [vmem:[%s3 + $0x40] sm:$0xff]
    %v169 = vld [vmem:[%s3 + $0x48] sm:$0xff]
    %v170 = vld [vmem:[%s3 + $0x50] sm:$0xff]
    %v171 = vld [vmem:[%s3 + $0x58] sm:$0xff]
    %v172 = vld [vmem:[%s3 + $0x60] sm:$0xff]
    %v173 = vld [vmem:[%s3 + $0x68] sm:$0xff]
    %v174 = vld [vmem:[%s3 + $0x70] sm:$0xff]
    %v175 = vld [vmem:[%s3 + $0x78] sm:$0xff]
    %v176 = vld [vmem:[%s4] sm:$0x1]
    %v178 = vlaneseq
    %v179 = vshrl.u32 %v178, 7
    %v180 = vsub.s32 0, %v179
    %v181 = vrot.slane %v176, %v180
    %183 = vmatprep.subr.mxu0 0.0
    %184 = vmatpush1.msra.mxu0 %v160
    %185 = vmatprep.subr.mxu0 0.0
    %186 = vmatpush1.msra.mxu0 %v161
    %187 = vmatprep.subr.mxu0 0.0
    %188 = vmatpush1.msra.mxu0 %v162
    %189 = vmatprep.subr.mxu0 0.0
    %190 = vmatpush1.msra.mxu0 %v163
    %191 = vmatprep.subr.mxu0 0.0
    %192 = vmatpush1.msra.mxu0 %v164
    %193 = vmatprep.subr.mxu0 0.0
    %194 = vmatpush1.msra.mxu0 %v165
    %195 = vmatprep.subr.mxu0 0.0
    %196 = vmatpush1.msra.mxu0 %v166
    %197 = vmatprep.subr.mxu0 0.0
    %198 = vmatpush1.msra.mxu0 %v167
    %199 = vmatprep.subr.mxu0 0.0
    %200 = vmatpush1.msra.mxu0 %v168
    %201 = vmatprep.subr.mxu0 0.0
    %202 = vmatpush1.msra.mxu0 %v169
    %203 = vmatprep.subr.mxu0 0.0
    %204 = vmatpush1.msra.mxu0 %v170
    %205 = vmatprep.subr.mxu0 0.0
    %206 = vmatpush1.msra.mxu0 %v171
    %207 = vmatprep.subr.mxu0 0.0
    %208 = vmatpush1.msra.mxu0 %v172
    %209 = vmatprep.subr.mxu0 0.0
    %210 = vmatpush1.msra.mxu0 %v173
    %211 = vmatprep.subr.mxu0 0.0
    %212 = vmatpush1.msra.mxu0 %v174
    %213 = vmatprep.subr.mxu0 0.0
    %214 = vmatpush1.msra.mxu0 %v175
    %215 = vmatprep.subr.mxu0 0.0
    %216 = vmatpush1.msra.mxu0 0.0
    %217 = vmatprep.subr.mxu0 0.0
    %218 = vmatpush1.msra.mxu0 0.0
    %219 = vmatprep.subr.mxu0 0.0
    %220 = vmatpush1.msra.mxu0 0.0
    %221 = vmatprep.subr.mxu0 0.0
    %222 = vmatpush1.msra.mxu0 0.0
    %223 = vmatprep.subr.mxu0 0.0
    %224 = vmatpush1.msra.mxu0 0.0
    %225 = vmatprep.subr.mxu0 0.0
    %226 = vmatpush1.msra.mxu0 0.0
    %227 = vmatprep.subr.mxu0 0.0
    %228 = vmatpush1.msra.mxu0 0.0
    %229 = vmatprep.subr.mxu0 0.0
    %230 = vmatpush1.msra.mxu0 0.0
    %231 = vmatprep.subr.mxu0 0.0
    %232 = vmatpush1.msra.mxu0 0.0
    %233 = vmatprep.subr.mxu0 0.0
    %234 = vmatpush1.msra.mxu0 0.0
    %235 = vmatprep.subr.mxu0 0.0
    %236 = vmatpush1.msra.mxu0 0.0
    %237 = vmatprep.subr.mxu0 0.0
    %238 = vmatpush1.msra.mxu0 0.0
    %239 = vmatprep.subr.mxu0 0.0
    %240 = vmatpush1.msra.mxu0 0.0
    %241 = vmatprep.subr.mxu0 0.0
    %242 = vmatpush1.msra.mxu0 0.0
    %243 = vmatprep.subr.mxu0 0.0
    %244 = vmatpush1.msra.mxu0 0.0
    %245 = vmatprep.subr.mxu0 0.0
    %246 = vmatpush1.msra.mxu0 0.0
    %247 = vmatprep.mubr.f32.mxu0 0.0
    %248 = vmatmul.mubr.f32.gmra.mrb[0].mxu0 %v159
    %v249 = vpop.f32.mrb[0].mxu0
    %v250 = vadd.f32 %v181, %v249
    %v251 = vpop.f32.mrb[0].mxu0
    %252 = vdwg.mxu0
    %v253 = vmax.f32 %v250, 0.0
    %v254 = vld [vmem:[#allocation2] sm:$0xff]
    %v255 = vld [vmem:[#allocation2 + $0x8] sm:$0xff]
    %v256 = vld [vmem:[#allocation2 + $0x10] sm:$0xff]
    %v257 = vld [vmem:[#allocation2 + $0x18] sm:$0xff]
    %v258 = vld [vmem:[#allocation2 + $0x20] sm:$0xff]
    %v259 = vld [vmem:[#allocation2 + $0x28] sm:$0xff]
    %v260 = vld [vmem:[#allocation2 + $0x30] sm:$0xff]
    %v261 = vld [vmem:[#allocation2 + $0x38] sm:$0xff]
    %v262 = vld [vmem:[%s6] sm:$0xff]
    %v263 = vld [vmem:[%s6 + $0x8] sm:$0xff]
    %v264 = vld [vmem:[%s6 + $0x10] sm:$0xff]
    %v265 = vld [vmem:[%s6 + $0x18] sm:$0xff]
    %v266 = vld [vmem:[%s6 + $0x20] sm:$0xff]
    %v267 = vld [vmem:[%s6 + $0x28] sm:$0xff]
    %v268 = vld [vmem:[%s6 + $0x30] sm:$0xff]
    %v269 = vld [vmem:[%s6 + $0x38] sm:$0xff]
    %v270 = vld [vmem:[%s6 + $0x40] sm:$0xff]
    %v271 = vld [vmem:[%s6 + $0x48] sm:$0xff]
    %v272 = vld [vmem:[%s6 + $0x50] sm:$0xff]
    %v273 = vld [vmem:[%s6 + $0x58] sm:$0xff]
    %v274 = vld [vmem:[%s6 + $0x60] sm:$0xff]
    %v275 = vld [vmem:[%s6 + $0x68] sm:$0xff]
    %v276 = vld [vmem:[%s6 + $0x70] sm:$0xff]
    %v277 = vld [vmem:[%s6 + $0x78] sm:$0xff]
    %v278 = vld [vmem:[%s7] sm:$0x1]
    %279 = vmatprep.subr.mxu0 0.0
    %280 = vmatpush1.msra.mxu0 %v262
    %281 = vmatprep.subr.mxu0 0.0
    %282 = vmatpush1.msra.mxu0 %v263
    %283 = vmatprep.subr.mxu0 0.0
    %284 = vmatpush1.msra.mxu0 %v264
    %285 = vmatprep.subr.mxu0 0.0
    %286 = vmatpush1.msra.mxu0 %v265
    %287 = vmatprep.subr.mxu0 0.0
    %288 = vmatpush1.msra.mxu0 %v266
    %289 = vmatprep.subr.mxu0 0.0
    %290 = vmatpush1.msra.mxu0 %v267
    %291 = vmatprep.subr.mxu0 0.0
    %292 = vmatpush1.msra.mxu0 %v268
    %293 = vmatprep.subr.mxu0 0.0
    %294 = vmatpush1.msra.mxu0 %v269
    %295 = vmatprep.subr.mxu0 0.0
    %296 = vmatpush1.msra.mxu0 %v270
    %297 = vmatprep.subr.mxu0 0.0
    %298 = vmatpush1.msra.mxu0 %v271
    %299 = vmatprep.subr.mxu0 0.0
    %300 = vmatpush1.msra.mxu0 %v272
    %301 = vmatprep.subr.mxu0 0.0
    %302 = vmatpush1.msra.mxu0 %v273
    %303 = vmatprep.subr.mxu0 0.0
    %304 = vmatpush1.msra.mxu0 %v274
    %305 = vmatprep.subr.mxu0 0.0
    %306 = vmatpush1.msra.mxu0 %v275
    %307 = vmatprep.subr.mxu0 0.0
    %308 = vmatpush1.msra.mxu0 %v276
    %309 = vmatprep.subr.mxu0 0.0
    %310 = vmatpush1.msra.mxu0 %v277
    %311 = vmatprep.subr.mxu0 0.0
    %312 = vmatpush1.msra.mxu0 0.0
    %313 = vmatprep.subr.mxu0 0.0
    %314 = vmatpush1.msra.mxu0 0.0
    %315 = vmatprep.subr.mxu0 0.0
    %316 = vmatpush1.msra.mxu0 0.0
    %317 = vmatprep.subr.mxu0 0.0
    %318 = vmatpush1.msra.mxu0 0.0
    %319 = vmatprep.subr.mxu0 0.0
    %320 = vmatpush1.msra.mxu0 0.0
    %321 = vmatprep.subr.mxu0 0.0
    %322 = vmatpush1.msra.mxu0 0.0
    %323 = vmatprep.subr.mxu0 0.0
    %324 = vmatpush1.msra.mxu0 0.0
    %325 = vmatprep.subr.mxu0 0.0
    %326 = vmatpush1.msra.mxu0 0.0
    %327 = vmatprep.subr.mxu0 0.0
    %328 = vmatpush1.msra.mxu0 0.0
    %329 = vmatprep.subr.mxu0 0.0
    %330 = vmatpush1.msra.mxu0 0.0
    %331 = vmatprep.subr.mxu0 0.0
    %332 = vmatpush1.msra.mxu0 0.0
    %333 = vmatprep.subr.mxu0 0.0
    %334 = vmatpush1.msra.mxu0 0.0
    %335 = vmatprep.subr.mxu0 0.0
    %336 = vmatpush1.msra.mxu0 0.0
    %337 = vmatprep.subr.mxu0 0.0
    %338 = vmatpush1.msra.mxu0 0.0
    %339 = vmatprep.subr.mxu0 0.0
    %340 = vmatpush1.msra.mxu0 0.0
    %341 = vmatprep.subr.mxu0 0.0
    %342 = vmatpush1.msra.mxu0 0.0
    %343 = vmatprep.mubr.f32.mxu0 0.0
    %344 = vmatmul.mubr.f32.gmra.mrb[0].mxu0 %v253
    %v345 = vpop.f32.mrb[0].mxu0
    %v346 = vadd.f32 0.0, %v345
    %v347 = vpop.f32.mrb[0].mxu0
    %348 = vdwg.mxu0
    %349 = vmatprep.subr.mxu0 0.0
    %350 = vmatpush1.msra.mxu0 %v254
    %351 = vmatprep.subr.mxu0 0.0
    %352 = vmatpush1.msra.mxu0 %v255
    %353 = vmatprep.subr.mxu0 0.0
    %354 = vmatpush1.msra.mxu0 %v256
    %355 = vmatprep.subr.mxu0 0.0
    %356 = vmatpush1.msra.mxu0 %v257
    %357 = vmatprep.subr.mxu0 0.0
    %358 = vmatpush1.msra.mxu0 %v258
    %359 = vmatprep.subr.mxu0 0.0
    %360 = vmatpush1.msra.mxu0 %v259
    %361 = vmatprep.subr.mxu0 0.0
    %362 = vmatpush1.msra.mxu0 %v260
    %363 = vmatprep.subr.mxu0 0.0
    %364 = vmatpush1.msra.mxu0 %v261
    %365 = vmatprep.subr.mxu0 0.0
    %366 = vmatpush1.msra.mxu0 0.0
    %367 = vmatprep.subr.mxu0 0.0
    %368 = vmatpush1.msra.mxu0 0.0
    %369 = vmatprep.subr.mxu0 0.0
    %370 = vmatpush1.msra.mxu0 0.0
    %371 = vmatprep.subr.mxu0 0.0
    %372 = vmatpush1.msra.mxu0 0.0
    %373 = vmatprep.subr.mxu0 0.0
    %374 = vmatpush1.msra.mxu0 0.0
    %375 = vmatprep.subr.mxu0 0.0
    %376 = vmatpush1.msra.mxu0 0.0
    %377 = vmatprep.subr.mxu0 0.0
    %378 = vmatpush1.msra.mxu0 0.0
    %379 = vmatprep.subr.mxu0 0.0
    %380 = vmatpush1.msra.mxu0 0.0
    %381 = vmatprep.subr.mxu0 0.0
    %382 = vmatpush1.msra.mxu0 0.0
    %383 = vmatprep.subr.mxu0 0.0
    %384 = vmatpush1.msra.mxu0 0.0
    %385 = vmatprep.subr.mxu0 0.0
    %386 = vmatpush1.msra.mxu0 0.0
    %387 = vmatprep.subr.mxu0 0.0
    %388 = vmatpush1.msra.mxu0 0.0
    %389 = vmatprep.subr.mxu0 0.0
    %390 = vmatpush1.msra.mxu0 0.0
    %391 = vmatprep.subr.mxu0 0.0
    %392 = vmatpush1.msra.mxu0 0.0
    %393 = vmatprep.subr.mxu0 0.0
    %394 = vmatpush1.msra.mxu0 0.0
    %395 = vmatprep.subr.mxu0 0.0
    %396 = vmatpush1.msra.mxu0 0.0
    %397 = vmatprep.subr.mxu0 0.0
    %398 = vmatpush1.msra.mxu0 0.0
    %399 = vmatprep.subr.mxu0 0.0
    %400 = vmatpush1.msra.mxu0 0.0
    %401 = vmatprep.subr.mxu0 0.0
    %402 = vmatpush1.msra.mxu0 0.0
    %403 = vmatprep.subr.mxu0 0.0
    %404 = vmatpush1.msra.mxu0 0.0
    %405 = vmatprep.subr.mxu0 0.0
    %406 = vmatpush1.msra.mxu0 0.0
    %407 = vmatprep.subr.mxu0 0.0
    %408 = vmatpush1.msra.mxu0 0.0
    %409 = vmatprep.subr.mxu0 0.0
    %410 = vmatpush1.msra.mxu0 0.0
    %411 = vmatprep.subr.mxu0 0.0
    %412 = vmatpush1.msra.mxu0 0.0
    %413 = vmatprep.mubr.f32.mxu0 0.0
    %414 = vmatmul.mubr.f32.gmra.mrb[0].mxu0 %v87
    %v415 = vpop.f32.mrb[0].mxu0
    %v416 = vadd.f32 %v346, %v415
    %v417 = vpop.f32.mrb[0].mxu0
    %418 = vdwg.mxu0
    %v420 = vlaneseq
    %v421 = vshrl.u32 %v420, 7
    %v422 = vsub.s32 0, %v421
    %v423 = vrot.slane %v278, %v422
    %v425 = vadd.f32 %v416, %v423
    %v426 = vmax.f32 %v425, 0.0
    %v427 = vld [vmem:[#allocation4] sm:$0xff]
    %v428 = vld [vmem:[#allocation4 + $0x8] sm:$0xff]
    %v429 = vld [vmem:[#allocation4 + $0x10] sm:$0xff]
    %v430 = vld [vmem:[#allocation4 + $0x18] sm:$0xff]
    %v431 = vld [vmem:[#allocation4 + $0x20] sm:$0xff]
    %v432 = vld [vmem:[#allocation4 + $0x28] sm:$0xff]
    %v433 = vld [vmem:[#allocation4 + $0x30] sm:$0xff]
    %v434 = vld [vmem:[#allocation4 + $0x38] sm:$0xff]
    %v435 = vld [vmem:[#allocation4 + $0x40] sm:$0xff]
    %v436 = vld [vmem:[#allocation4 + $0x48] sm:$0xff]
    %v437 = vld [vmem:[#allocation4 + $0x50] sm:$0xff]
    %v438 = vld [vmem:[#allocation4 + $0x58] sm:$0xff]
    %v439 = vld [vmem:[#allocation4 + $0x60] sm:$0xff]
    %v440 = vld [vmem:[#allocation4 + $0x68] sm:$0xff]
    %v441 = vld [vmem:[#allocation4 + $0x70] sm:$0xff]
    %v442 = vld [vmem:[#allocation4 + $0x78] sm:$0xff]
    %v443 = vld [vmem:[%s9] sm:$0x1]
    %v445 = vlaneseq
    %v446 = vshrl.u32 %v445, 7
    %v447 = vsub.s32 0, %v446
    %v448 = vrot.slane %v443, %v447
    %450 = vmatprep.subr.mxu0 0.0
    %451 = vmatpush1.msra.mxu0 %v427
    %452 = vmatprep.subr.mxu0 0.0
    %453 = vmatpush1.msra.mxu0 %v428
    %454 = vmatprep.subr.mxu0 0.0
    %455 = vmatpush1.msra.mxu0 %v429
    %456 = vmatprep.subr.mxu0 0.0
    %457 = vmatpush1.msra.mxu0 %v430
    %458 = vmatprep.subr.mxu0 0.0
    %459 = vmatpush1.msra.mxu0 %v431
    %460 = vmatprep.subr.mxu0 0.0
    %461 = vmatpush1.msra.mxu0 %v432
    %462 = vmatprep.subr.mxu0 0.0
    %463 = vmatpush1.msra.mxu0 %v433
    %464 = vmatprep.subr.mxu0 0.0
    %465 = vmatpush1.msra.mxu0 %v434
    %466 = vmatprep.subr.mxu0 0.0
    %467 = vmatpush1.msra.mxu0 %v435
    %468 = vmatprep.subr.mxu0 0.0
    %469 = vmatpush1.msra.mxu0 %v436
    %470 = vmatprep.subr.mxu0 0.0
    %471 = vmatpush1.msra.mxu0 %v437
    %472 = vmatprep.subr.mxu0 0.0
    %473 = vmatpush1.msra.mxu0 %v438
    %474 = vmatprep.subr.mxu0 0.0
    %475 = vmatpush1.msra.mxu0 %v439
    %476 = vmatprep.subr.mxu0 0.0
    %477 = vmatpush1.msra.mxu0 %v440
    %478 = vmatprep.subr.mxu0 0.0
    %479 = vmatpush1.msra.mxu0 %v441
    %480 = vmatprep.subr.mxu0 0.0
    %481 = vmatpush1.msra.mxu0 %v442
    %482 = vmatprep.subr.mxu0 0.0
    %483 = vmatpush1.msra.mxu0 0.0
    %484 = vmatprep.subr.mxu0 0.0
    %485 = vmatpush1.msra.mxu0 0.0
    %486 = vmatprep.subr.mxu0 0.0
    %487 = vmatpush1.msra.mxu0 0.0
    %488 = vmatprep.subr.mxu0 0.0
    %489 = vmatpush1.msra.mxu0 0.0
    %490 = vmatprep.subr.mxu0 0.0
    %491 = vmatpush1.msra.mxu0 0.0
    %492 = vmatprep.subr.mxu0 0.0
    %493 = vmatpush1.msra.mxu0 0.0
    %494 = vmatprep.subr.mxu0 0.0
    %495 = vmatpush1.msra.mxu0 0.0
    %496 = vmatprep.subr.mxu0 0.0
    %497 = vmatpush1.msra.mxu0 0.0
    %498 = vmatprep.subr.mxu0 0.0
    %499 = vmatpush1.msra.mxu0 0.0
    %500 = vmatprep.subr.mxu0 0.0
    %501 = vmatpush1.msra.mxu0 0.0
    %502 = vmatprep.subr.mxu0 0.0
    %503 = vmatpush1.msra.mxu0 0.0
    %504 = vmatprep.subr.mxu0 0.0
    %505 = vmatpush1.msra.mxu0 0.0
    %506 = vmatprep.subr.mxu0 0.0
    %507 = vmatpush1.msra.mxu0 0.0
    %508 = vmatprep.subr.mxu0 0.0
    %509 = vmatpush1.msra.mxu0 0.0
    %510 = vmatprep.subr.mxu0 0.0
    %511 = vmatpush1.msra.mxu0 0.0
    %512 = vmatprep.subr.mxu0 0.0
    %513 = vmatpush1.msra.mxu0 0.0
    %514 = vmatprep.mubr.f32.mxu0 0.0
    %515 = vmatmul.mubr.f32.gmra.mrb[0].mxu0 %v426
    %v516 = vpop.f32.mrb[0].mxu0
    %v517 = vadd.f32 %v448, %v516
    %v518 = vpop.f32.mrb[0].mxu0
    %519 = vdwg.mxu0
    %v520 = vmax.f32 %v517, 0.0
    %v521 = vld [vmem:[%s10] sm:$0xff]
    %v522 = vld [vmem:[%s10 + $0x8] sm:$0xff]
    %v523 = vld [vmem:[%s10 + $0x10] sm:$0xff]
    %v524 = vld [vmem:[%s10 + $0x18] sm:$0xff]
    %v525 = vld [vmem:[%s10 + $0x20] sm:$0xff]
    %v526 = vld [vmem:[%s10 + $0x28] sm:$0xff]
    %v527 = vld [vmem:[%s10 + $0x30] sm:$0xff]
    %v528 = vld [vmem:[%s10 + $0x38] sm:$0xff]
    %v529 = vld [vmem:[%s10 + $0x40] sm:$0xff]
    %v530 = vld [vmem:[%s10 + $0x48] sm:$0xff]
    %v531 = vld [vmem:[%s10 + $0x50] sm:$0xff]
    %v532 = vld [vmem:[%s10 + $0x58] sm:$0xff]
    %v533 = vld [vmem:[%s10 + $0x60] sm:$0xff]
    %v534 = vld [vmem:[%s10 + $0x68] sm:$0xff]
    %v535 = vld [vmem:[%s10 + $0x70] sm:$0xff]
    %v536 = vld [vmem:[%s10 + $0x78] sm:$0xff]
    %v537 = vld [vmem:[%s11] sm:$0x1]
    %v539 = vlaneseq
    %v540 = vshrl.u32 %v539, 7
    %v541 = vsub.s32 0, %v540
    %v542 = vrot.slane %v537, %v541
    %544 = vmatprep.subr.mxu0 0.0
    %545 = vmatpush1.msra.mxu0 %v521
    %546 = vmatprep.subr.mxu0 0.0
    %547 = vmatpush1.msra.mxu0 %v522
    %548 = vmatprep.subr.mxu0 0.0
    %549 = vmatpush1.msra.mxu0 %v523
    %550 = vmatprep.subr.mxu0 0.0
    %551 = vmatpush1.msra.mxu0 %v524
    %552 = vmatprep.subr.mxu0 0.0
    %553 = vmatpush1.msra.mxu0 %v525
    %554 = vmatprep.subr.mxu0 0.0
    %555 = vmatpush1.msra.mxu0 %v526
    %556 = vmatprep.subr.mxu0 0.0
    %557 = vmatpush1.msra.mxu0 %v527
    %558 = vmatprep.subr.mxu0 0.0
    %559 = vmatpush1.msra.mxu0 %v528
    %560 = vmatprep.subr.mxu0 0.0
    %561 = vmatpush1.msra.mxu0 %v529
    %562 = vmatprep.subr.mxu0 0.0
    %563 = vmatpush1.msra.mxu0 %v530
    %564 = vmatprep.subr.mxu0 0.0
    %565 = vmatpush1.msra.mxu0 %v531
    %566 = vmatprep.subr.mxu0 0.0
    %567 = vmatpush1.msra.mxu0 %v532
    %568 = vmatprep.subr.mxu0 0.0
    %569 = vmatpush1.msra.mxu0 %v533
    %570 = vmatprep.subr.mxu0 0.0
    %571 = vmatpush1.msra.mxu0 %v534
    %572 = vmatprep.subr.mxu0 0.0
    %573 = vmatpush1.msra.mxu0 %v535
    %574 = vmatprep.subr.mxu0 0.0
    %575 = vmatpush1.msra.mxu0 %v536
    %576 = vmatprep.subr.mxu0 0.0
    %577 = vmatpush1.msra.mxu0 0.0
    %578 = vmatprep.subr.mxu0 0.0
    %579 = vmatpush1.msra.mxu0 0.0
    %580 = vmatprep.subr.mxu0 0.0
    %581 = vmatpush1.msra.mxu0 0.0
    %582 = vmatprep.subr.mxu0 0.0
    %583 = vmatpush1.msra.mxu0 0.0
    %584 = vmatprep.subr.mxu0 0.0
    %585 = vmatpush1.msra.mxu0 0.0
    %586 = vmatprep.subr.mxu0 0.0
    %587 = vmatpush1.msra.mxu0 0.0
    %588 = vmatprep.subr.mxu0 0.0
    %589 = vmatpush1.msra.mxu0 0.0
    %590 = vmatprep.subr.mxu0 0.0
    %591 = vmatpush1.msra.mxu0 0.0
    %592 = vmatprep.subr.mxu0 0.0
    %593 = vmatpush1.msra.mxu0 0.0
    %594 = vmatprep.subr.mxu0 0.0
    %595 = vmatpush1.msra.mxu0 0.0
    %596 = vmatprep.subr.mxu0 0.0
    %597 = vmatpush1.msra.mxu0 0.0
    %598 = vmatprep.subr.mxu0 0.0
    %599 = vmatpush1.msra.mxu0 0.0
    %600 = vmatprep.subr.mxu0 0.0
    %601 = vmatpush1.msra.mxu0 0.0
    %602 = vmatprep.subr.mxu0 0.0
    %603 = vmatpush1.msra.mxu0 0.0
    %604 = vmatprep.subr.mxu0 0.0
    %605 = vmatpush1.msra.mxu0 0.0
    %606 = vmatprep.subr.mxu0 0.0
    %607 = vmatpush1.msra.mxu0 0.0
    %608 = vmatprep.mubr.f32.mxu0 0.0
    %609 = vmatmul.mubr.f32.gmra.mrb[0].mxu0 %v520
    %v610 = vpop.f32.mrb[0].mxu0
    %v611 = vadd.f32 %v542, %v610
    %v612 = vpop.f32.mrb[0].mxu0
    %613 = vdwg.mxu0
    %vm614 = vcmask 130048
    %615 = vst.msk [vmem:[%s12] sm:$0xff] %vm614, %v611
    // Predicated region
    $region58: #{base_mlp_forward.1} parent=1 // pred_check
      _
    $region59: #{base_mlp_forward.1} parent=1 // pred_check_branch
      %617 = sbr.rel (0) target = $region61
    $region60: #{base_mlp_forward.1} parent=1 // pred_region
      _
    $region61: #{base_mlp_forward.1} parent=1 // pred_fallthru
      _
    // Predicated region
    $region62: #{base_mlp_forward.1} parent=1 // pred_check
      _
    $region63: #{base_mlp_forward.1} parent=1 // pred_check_branch
      %619 = sbr.rel (0) target = $region65
    $region64: #{base_mlp_forward.1} parent=1 // pred_region
      _
    $region65: #{base_mlp_forward.1} parent=1 // pred_fallthru
      _
    %620 = vsyncpa [#allocation3], 1
    %621 = vsyncpa [#allocation5], 1

</llo_original>
